<compile_context>
chip_gen: v5e
topology: v5e:2x2
jax: 0.10.0
libtpu: 0.0.40
codegen_flags: <defaults>
</compile_context>

<pallas_src>
import jax
import jax.numpy as jnp
from jax.experimental import pallas as pl
from jax.experimental.pallas import tpu as pltpu


def _copy_kernel(x_ref, o_ref):
    # Pure pass-through: the stub Generator performs no computation.
    o_ref[...] = x_ref[...]


def _choose_lane_width(total: int):
    """Largest of {1024, 512, 256, 128} that divides `total`, else None."""
    for lane in (1024, 512, 256, 128):
        if total % lane == 0:
            return lane
    return None


def _sublane_multiple(dtype) -> int:
    """Native sublane packing multiple for the dtype (8/16/32 rows)."""
    itemsize = jnp.dtype(dtype).itemsize
    if itemsize >= 4:
        return 8
    if itemsize == 2:
        return 16
    return 32  # int8 / fp8


def pallas_identity(x: jax.Array) -> jax.Array:
    """Identity copy of x executed as a lane-dense, tiled Pallas kernel."""
    orig_shape = x.shape
    total = x.size
    if total == 0:
        return x

    itemsize = jnp.dtype(x.dtype).itemsize
    sublane = _sublane_multiple(x.dtype)

    flat = x.reshape(-1)
    lane = _choose_lane_width(total)
    padded_total = total
    if lane is None:
        # Element count not a multiple of 128: pad wrapper-side so the kernel
        # always sees a lane-dense (unmasked-vst) slab, then slice back.
        lane = 128
        padded_total = ((total + lane - 1) // lane) * lane
        flat = jnp.pad(flat, (0, padded_total - total))

    rows = padded_total // lane
    x2 = flat.reshape(rows, lane)

    # Fixed ~2 MiB tiles: measured tiled-copy data puts 2 MiB tiles at ~85% of
    # HBM roofline, and (in + out) * double-buffering = 8 MiB fits the default
    # scoped VMEM on v5e (16 MiB) and v6e/v7x (32 MiB) with no override.
    target_tile_bytes = 2 << 20
    target_rows = target_tile_bytes // (lane * itemsize)
    target_rows = max(sublane, (target_rows // sublane) * sublane)

    if rows <= target_rows:
        # Whole slab (< ~2 MiB) in one grid step; full-extent row dim is
        # exempt from the sublane-divisibility rule.
        tile_rows = rows
    else:
        # Fixed dtype-aligned tile; cdiv grid lets Pallas mask the ragged
        # last block. rows > target_rows guarantees >= 2 grid steps, so the
        # "parallel" axis can shard DMA issue across v7x's two TensorCores.
        tile_rows = target_rows

    grid_rows = pl.cdiv(rows, tile_rows)

    y2 = pl.pallas_call(
        _copy_kernel,
        out_shape=jax.ShapeDtypeStruct((rows, lane), x.dtype),
        grid=(grid_rows,),
        in_specs=[pl.BlockSpec((tile_rows, lane), lambda i: (i, 0))],
        out_specs=pl.BlockSpec((tile_rows, lane), lambda i: (i, 0)),
        compiler_params=pltpu.CompilerParams(
            # Parallel row axis: v7x's 2 TensorCores split the copy whenever
            # grid_rows > 1 (harmless no-op on 1-TC v5e/v6e or grid of 1).
            dimension_semantics=("parallel",),
        ),
    )(x2)

    y_flat = y2.reshape(-1)
    if padded_total != total:
        y_flat = y_flat[:total]
    return y_flat.reshape(orig_shape)


def generator_forward(x: jax.Array):
    """Faithful reproduction of Generator.forward: the stub returns None."""
    # TODO(synk): Generator.forward is an empty stub (`pass`) in the reference
    # module -- there is no computation to lower to Pallas, so no kernel is
    # launched here.
    del x
    return None


if __name__ == "__main__":
    key = jax.random.PRNGKey(0)
    k0, k1, k2 = jax.random.split(key, 3)

    # Small NCHW input consistent with a GAN-style image generator interface.
    x = jax.random.normal(k0, (2, 4, 16, 16), dtype=jnp.float32)
    y = pallas_identity(x)
    jax.block_until_ready(y)
    assert y.shape == x.shape and y.dtype == x.dtype
    assert bool(jnp.all(y == x))

    # Exercise the non-lane-aligned padding fallback (105 elements).
    x_pad = jax.random.normal(k1, (3, 5, 7), dtype=jnp.float32)
    y_pad = pallas_identity(x_pad)
    jax.block_until_ready(y_pad)
    assert bool(jnp.all(y_pad == x_pad))

    # Exercise the multi-step cdiv grid with a ragged last block
    # (520 rows of 1024 f32 -> tile_rows=512, grid=2, last block 8 rows).
    x_big = jax.random.normal(k2, (520, 1024), dtype=jnp.float32)
    y_big = pallas_identity(x_big)
    jax.block_until_ready(y_big)
    assert bool(jnp.all(y_big == x_big))

    # Exercise a sub-32-bit dtype (sublane multiple = 16 path).
    x_bf16 = x.astype(jnp.bfloat16)
    y_bf16 = pallas_identity(x_bf16)
    jax.block_until_ready(y_bf16)
    assert y_bf16.dtype == jnp.bfloat16 and bool(jnp.all(y_bf16 == x_bf16))

    # Faithful forward semantics: returns None, just like the PyTorch stub,
    # and launches no dead work.
    out = generator_forward(x)
    assert out is None

    print("KERNEL_OK")
</pallas_src>

<mosaic_0001>
module attributes {stable_mosaic.version = 11 : i64} {
  func.func @_copy_kernel(%arg0: i32, %arg1: memref<2x1024xf32, #tpu.memory_space<vmem>>, %arg2: memref<2x1024xf32, #tpu.memory_space<vmem>>) attributes {dimension_semantics = [#tpu.dimension_semantics<parallel>], iteration_bounds = array<i64: 1>, scalar_prefetch = 0 : i64, scratch_operands = 0 : i64, tpu.core_type = #tpu.core_type<tc>, window_params = [{transform_indices = @transform_0, window_bounds = array<i64: 2, 1024>}, {transform_indices = @transform_1, window_bounds = array<i64: 2, 1024>}]} {
    %c0 = arith.constant 0 : index
    %c0_0 = arith.constant 0 : index
    %0 = vector.load %arg1[%c0, %c0_0] : memref<2x1024xf32, #tpu.memory_space<vmem>>, vector<2x1024xf32>
    %c0_1 = arith.constant 0 : index
    %c0_2 = arith.constant 0 : index
    %1 = vector.load %arg2[%c0_1, %c0_2] : memref<2x1024xf32, #tpu.memory_space<vmem>>, vector<2x1024xf32>
    tpu.vector_store %arg2[%c0_1, %c0_2], %0 {strides = array<i32>} : memref<2x1024xf32, #tpu.memory_space<vmem>>, vector<2x1024xf32>,
    return
  }
  func.func @transform_0(%arg0: i32) -> (i32, i32) {
    %c0_i32 = arith.constant 0 : i32
    %c0_i32_0 = arith.constant 0 : i32
    return %arg0, %c0_i32 : i32, i32
  }
  func.func @transform_1(%arg0: i32) -> (i32, i32) {
    %c0_i32 = arith.constant 0 : i32
    %c0_i32_0 = arith.constant 0 : i32
    return %arg0, %c0_i32 : i32, i32
  }
}

</mosaic_0001>

<llo_original>
// kernel: tpu_custom_call.1
$region0: #{tpu_custom_call.1}
  #allocation0 [shape = 'u32[]', space=smem, size = 0x4, offset = 0x4, fixed_abs, tag = 'smem constant byte address 0x4 - core index']
  #allocation1 [shape = 'u32[72,128]{1,0:T(1,128)}', space=vmem, size = 0x9000, scoped, tag = 'internal scratch']
  %s0 = inlined_call_operand.hbm [shape: f32[2,1024], index: 0, kind: input, shape index: {}]
  %s1 = inlined_call_operand.hbm [shape: f32[2,1024], index: 1, kind: output, shape index: {}]
  %s2 = sld [smem:[#allocation0]]
  $region18: #{tpu_custom_call.1} parent=0
    _
  %s4 = ssub.s32 1, %s2
  %s5 = scalar_select 0, %s4, %s2
  $region1: #{tpu_custom_call.1} parent=0
    #allocation2 [shape = 'u8[8192]{0}', space=vmem, size = 0x2000, scoped, tag = 'input window, operand 0, single buffered']
    #allocation3 [shape = 's32[1]{0}', space=sflag, size = 0x4, scoped, tag = 'scoped memory for tpu_custom_call.1']
    #allocation4 [shape = 's32[1]{0}', space=sflag, size = 0x4, scoped, tag = 'scoped memory for tpu_custom_call.1']
    #allocation5 [shape = 'u8[8192]{0}', space=vmem, size = 0x2000, scoped, tag = 'output window, operand 0, single buffered']
    %6 = vsyncpa [#allocation3], 0
    %7 = vsyncpa [#allocation4], 0
    // Predicated region
    $region2: #{tpu_custom_call.1} parent=1 // pred_check
      _
    $region3: #{tpu_custom_call.1} parent=1 // pred_check_branch
      %9 = sbr.rel (0) target = $region5
    $region4: #{tpu_custom_call.1} parent=1 // pred_region
      %11 = vsyncadd [#allocation3], 0
      %s13 = sshll.u32 %s0, 4
      %s14 = int_to_ptr.hbm [resolvable:$true] %s13
      %s15 = sshll.u32 [#allocation2], 4
      %s16 = int_to_ptr.vmem [resolvable:$true] %s15
      %18 = dma.hbm_to_vmem [thread:$0]  %s14, 256, %s16, [#allocation3]
    $region5: #{tpu_custom_call.1} parent=1 // pred_fallthru
      _
    // Predicated region
    $region6: #{tpu_custom_call.1} parent=1 // pred_check
      _
    $region7: #{tpu_custom_call.1} parent=1 // pred_check_branch
      %20 = sbr.rel (0) target = $region9
    $region8: #{tpu_custom_call.1} parent=1 // pred_region
      %22 = dma.done [#allocation3], 256
    $region9: #{tpu_custom_call.1} parent=1 // pred_fallthru
      _
    %v23 = vld [vmem:[#allocation2] sm:$0xff]
    %v24 = vld [vmem:[#allocation2 + $0x8] sm:$0xff]
    %25 = vst [vmem:[#allocation5] sm:$0xff] %v23
    %26 = vst [vmem:[#allocation5 + $0x8] sm:$0xff] %v24
    // Predicated region
    $region10: #{tpu_custom_call.1} parent=1 // pred_check
      _
    $region11: #{tpu_custom_call.1} parent=1 // pred_check_branch
      %28 = sbr.rel (0) target = $region13
    $region12: #{tpu_custom_call.1} parent=1 // pred_region
      %30 = vsyncadd [#allocation4], 0
      %s32 = sshll.u32 [#allocation5], 4
      %s33 = int_to_ptr.vmem [resolvable:$true] %s32
      %s34 = sshll.u32 %s1, 4
      %s35 = int_to_ptr.hbm [resolvable:$true] %s34
      %37 = dma.vmem_to_hbm [thread:$0]  %s33, 256, %s35, [#allocation4]
    $region13: #{tpu_custom_call.1} parent=1 // pred_fallthru
      _
    // Predicated region
    $region14: #{tpu_custom_call.1} parent=1 // pred_check
      _
    $region15: #{tpu_custom_call.1} parent=1 // pred_check_branch
      %39 = sbr.rel (0) target = $region17
    $region16: #{tpu_custom_call.1} parent=1 // pred_region
      %41 = dma.done [#allocation4], 256
    $region17: #{tpu_custom_call.1} parent=1 // pred_fallthru
      _
    %42 = vsyncpa [#allocation3], 1
    %43 = vsyncpa [#allocation4], 1

</llo_original>
